<compile_context>
chip_gen: v7x
topology: tpu7x:2x2x1
jax: 0.10.0
libtpu: 0.0.40
codegen_flags: <defaults>
</compile_context>

<pallas_src>
import functools

import jax
import jax.numpy as jnp
from jax.experimental import pallas as pl
from jax.experimental.pallas import tpu as pltpu


def critic_kernel(x_ref, w1_ref, b1w2_ref, b2_ref, out_ref):
    # x_ref:   (TB, D)  f32          w1_ref: (D, H)  f32 or bf16 (pre-cast outside)
    # b1w2_ref:(2, H)   f32          b2_ref: (1,)    f32 in SMEM
    # out_ref: (1, TB)  lane-dense value row
    x = x_ref[...].astype(w1_ref.dtype)        # only x is cast per step; W1 pre-cast once
    bw = b1w2_ref[...]
    b1 = bw[0:1, :]                            # (1, H)
    w2 = bw[1:2, :]                            # (1, H)

    # fc1 on the MXU, f32 accumulate; bias + ReLU epilogue on the VPU in f32.
    h = jnp.dot(x, w1_ref[...], preferred_element_type=jnp.float32)   # (TB, H)
    h = jnp.maximum(h + b1, 0.0)

    # fc2 (H -> 1) producing a lane-dense (1, TB) row: transpose h so the batch lives in
    # lanes (XLU), then a (1,H)@(H,TB) MXU matmul gives the value row directly.
    hT = h.T                                                           # (H, TB)
    v = jnp.dot(w2, hT, preferred_element_type=jnp.float32)           # (1, TB)
    out_ref[...] = (v + b2_ref[0]).astype(out_ref.dtype)


def prepare_critic_params(w1, b1, w2, b2, *, w1_dtype=jnp.bfloat16):
    """torch layout -> kernel layout. Call once, OUTSIDE the jitted hot path."""
    H, D = w1.shape
    w1_t = w1.T.astype(w1_dtype)                               # (D, H), pre-cast once
    b1w2 = jnp.stack(
        [b1.astype(jnp.float32), w2.reshape(H).astype(jnp.float32)], axis=0)  # (2, H)
    b2_s = b2.reshape(1).astype(jnp.float32)                   # (1,): scalar -> SMEM
    return w1_t, b1w2, b2_s


@functools.partial(jax.jit, static_argnames=("tb",))
def critic_forward(x, w1_t, b1w2, b2_s, tb=2048):
    """x: (B, D) float32. Params in kernel layout (see prepare_critic_params)."""
    B, D = x.shape
    H = w1_t.shape[1]
    out_dtype = x.dtype

    if B < 128:
        # Tiny batch: pad to one 128-lane tile (negligible bytes) so every block stays
        # fully (8,128)-aligned on the lane-dense output path.
        Bp = 128
        x = jnp.pad(x, ((0, Bp - B), (0, 0)))
        TB = 128
    else:
        # Large batch: no jnp.pad (that would be an extra HBM pass over x); the grid is
        # cdiv and Pallas masks the partial last tile's reads/writes.
        Bp = B
        TB = min(tb, (B // 128) * 128)   # multiple of 128, <= B, >=2 tiles stays possible
    grid = pl.cdiv(Bp, TB)

    cost = pl.CostEstimate(
        flops=2 * Bp * D * H + 2 * Bp * H,
        transcendentals=0,
        bytes_accessed=(Bp * D * x.dtype.itemsize
                        + D * H * w1_t.dtype.itemsize
                        + 2 * H * 4 + 4 + Bp * 4),
    )

    out = pl.pallas_call(
        critic_kernel,
        out_shape=jax.ShapeDtypeStruct((1, Bp), out_dtype),
        grid_spec=pltpu.PrefetchScalarGridSpec(
            num_scalar_prefetch=0,
            grid=(grid,),
            in_specs=[
                pl.BlockSpec((TB, D), lambda i: (i, 0)),            # x: batch-tiled, pipelined
                pl.BlockSpec((D, H), lambda i: (0, 0)),             # W1^T: VMEM-resident
                pl.BlockSpec((2, H), lambda i: (0, 0)),             # [b1; w2]: VMEM-resident
                pl.BlockSpec(memory_space=pltpu.MemorySpace.SMEM),  # b2 scalar in SMEM
            ],
            out_specs=pl.BlockSpec((1, TB), lambda i: (0, i)),      # lane-dense value row
        ),
        compiler_params=pltpu.CompilerParams(
            dimension_semantics=("parallel",),   # shard batch tiles across TCs
        ),
        cost_estimate=cost,
    )(x, w1_t, b1w2, b2_s)
    return out[0, :B].reshape(B, 1)


def orthogonal_init(key, shape, scale=1.0, dtype=jnp.float32):
    """Deterministic orthogonal init (mirrors torch.nn.init.orthogonal_ semantics)."""
    rows, cols = shape
    n = max(rows, cols)
    a = jax.random.normal(key, (n, min(rows, cols)), dtype=jnp.float32)
    q, r = jnp.linalg.qr(a)
    d = jnp.sign(jnp.diagonal(r))
    q = q * d[None, :]
    if rows < cols:
        q = q.T
    return (scale * q[:rows, :cols]).astype(dtype)


def make_critic_params(key, input_size, hidden_size=128):
    k1, k2 = jax.random.split(key)
    w1 = orthogonal_init(k1, (hidden_size, input_size), scale=2.0)   # fc1.weight (per spec)
    b1 = jnp.zeros((hidden_size,), jnp.float32)                      # fc1.bias = 0
    w2 = orthogonal_init(k2, (1, hidden_size), scale=1.0)            # fc2.weight
    b2 = jnp.zeros((1,), jnp.float32)                                # fc2.bias = 0
    return w1, b1, w2, b2


def _reference_f32(x, w1, b1, w2, b2):
    return jnp.maximum(x @ w1.T + b1, 0.0) @ w2.T + b2


def _reference_bf16(x, w1, b1, w2, b2):
    h = jnp.dot(x.astype(jnp.bfloat16), w1.T.astype(jnp.bfloat16),
                preferred_element_type=jnp.float32)
    h = jnp.maximum(h + b1[None, :], 0.0)
    return h @ w2.T.astype(jnp.float32) + b2


if __name__ == "__main__":
    key = jax.random.PRNGKey(0)
    k_x, k_x2, k_x3, k_p = jax.random.split(key, 4)

    D = 32    # input_size
    H = 128   # hidden_size (module default)

    w1, b1, w2, b2 = make_critic_params(k_p, D, H)
    p_f32 = prepare_critic_params(w1, b1, w2, b2, w1_dtype=jnp.float32)   # exact-parity params
    p_bf16 = prepare_critic_params(w1, b1, w2, b2, w1_dtype=jnp.bfloat16)  # throughput params

    # Case 1: tiny batch (B=8) -> single padded 128-row tile, f32 weights, exact check.
    x = jax.random.normal(k_x, (8, D), dtype=jnp.float32)
    out = jax.block_until_ready(critic_forward(x, *p_f32))
    ref = _reference_f32(x, w1, b1, w2, b2)
    assert out.shape == (8, 1)
    assert jnp.allclose(out, ref, atol=1e-4, rtol=1e-4), float(jnp.max(jnp.abs(out - ref)))

    # Case 2: same batch, bf16-operand MXU path (default deployment config).
    out_bf = jax.block_until_ready(critic_forward(x, *p_bf16))
    ref_bf = _reference_bf16(x, w1, b1, w2, b2)
    assert jnp.allclose(out_bf, ref_bf, atol=1e-3, rtol=1e-3)   # matched-precision check
    assert jnp.allclose(out_bf, ref, atol=2.5e-1, rtol=5e-2)    # loose vs full-f32 forward

    # Case 3: B=20 (not a multiple of 8) -> padded single tile path, exact check.
    x2 = jax.random.normal(k_x2, (20, D), dtype=jnp.float32)
    out2 = jax.block_until_ready(critic_forward(x2, *p_f32))
    ref2 = _reference_f32(x2, w1, b1, w2, b2)
    assert out2.shape == (20, 1)
    assert jnp.allclose(out2, ref2, atol=1e-4, rtol=1e-4)

    # Case 4: B=200 with tb=128 -> multi-tile cdiv grid with a masked partial last tile;
    # exercises the no-pad large-batch path at a small size.
    x3 = jax.random.normal(k_x3, (200, D), dtype=jnp.float32)
    out3 = jax.block_until_ready(critic_forward(x3, *p_f32, tb=128))
    ref3 = _reference_f32(x3, w1, b1, w2, b2)
    assert out3.shape == (200, 1)
    assert jnp.allclose(out3, ref3, atol=1e-4, rtol=1e-4)

    print("KERNEL_OK")
</pallas_src>

<mosaic_0001>
module attributes {stable_mosaic.version = 11 : i64} {
  func.func @critic_kernel(%arg0: i32, %arg1: memref<128x32xf32, #tpu.memory_space<vmem>>, %arg2: memref<32x128xf32, #tpu.memory_space<vmem>>, %arg3: memref<2x128xf32, #tpu.memory_space<vmem>>, %arg4: memref<1xf32, #tpu.memory_space<smem>>, %arg5: memref<1x128xf32, #tpu.memory_space<vmem>>) attributes {dimension_semantics = [#tpu.dimension_semantics<parallel>], iteration_bounds = array<i64: 1>, scalar_prefetch = 0 : i64, scratch_operands = 0 : i64, tpu.core_type = #tpu.core_type<tc>, window_params = [{transform_indices = @transform_0, window_bounds = array<i64: 128, 32>}, {pipeline_mode = #tpu.pipeline_mode<synchronous>, transform_indices = @transform_1, window_bounds = array<i64: 32, 128>}, {pipeline_mode = #tpu.pipeline_mode<synchronous>, transform_indices = @transform_2, window_bounds = array<i64: 2, 128>}, {transform_indices = @transform_3, window_bounds = array<i64: 1>}, {transform_indices = @transform_4, window_bounds = array<i64: 1, 128>}]} {
    %c0 = arith.constant 0 : index
    %c0_0 = arith.constant 0 : index
    %0 = vector.load %arg1[%c0, %c0_0] : memref<128x32xf32, #tpu.memory_space<vmem>>, vector<128x32xf32>
    %c0_1 = arith.constant 0 : index
    %c0_2 = arith.constant 0 : index
    %1 = vector.load %arg3[%c0_1, %c0_2] : memref<2x128xf32, #tpu.memory_space<vmem>>, vector<2x128xf32>
    %2 = vector.extract_strided_slice %1 {offsets = [0, 0], sizes = [1, 128], strides = [1, 1]} : vector<2x128xf32> to vector<1x128xf32>
    %3 = vector.extract_strided_slice %1 {offsets = [1, 0], sizes = [1, 128], strides = [1, 1]} : vector<2x128xf32> to vector<1x128xf32>
    %c0_3 = arith.constant 0 : index
    %c0_4 = arith.constant 0 : index
    %4 = vector.load %arg2[%c0_3, %c0_4] : memref<32x128xf32, #tpu.memory_space<vmem>>, vector<32x128xf32>
    %cst = arith.constant dense<0.000000e+00> : vector<128x128xf32>
    %5 = tpu.matmul %0, %4, %cst {dimension_numbers = #tpu.dot_dimension_numbers<[1], [0], [0], [1], [0, 0, 1, 1], [], []>} : vector<128x32xf32>, vector<32x128xf32>, vector<128x128xf32> -> vector<128x128xf32>
    %6 = vector.broadcast %2 : vector<1x128xf32> to vector<128x128xf32>
    %7 = arith.addf %5, %6 : vector<128x128xf32>
    %cst_5 = arith.constant 0.000000e+00 : f32
    %8 = vector.broadcast %cst_5 : f32 to vector<128x128xf32>
    %9 = arith.maximumf %7, %8 : vector<128x128xf32>
    %10 = tpu.transpose %9, [1, 0] : vector<128x128xf32> -> vector<128x128xf32>
    %cst_6 = arith.constant dense<0.000000e+00> : vector<1x128xf32>
    %11 = tpu.matmul %3, %10, %cst_6 {dimension_numbers = #tpu.dot_dimension_numbers<[1], [0], [0], [1], [0, 0, 1, 1], [], []>} : vector<1x128xf32>, vector<128x128xf32>, vector<1x128xf32> -> vector<1x128xf32>
    %c0_7 = arith.constant 0 : index
    %12 = memref.load %arg4[%c0_7] : memref<1xf32, #tpu.memory_space<smem>>
    %13 = vector.broadcast %12 : f32 to vector<1x128xf32>
    %14 = arith.addf %11, %13 : vector<1x128xf32>
    %c0_8 = arith.constant 0 : index
    %c0_9 = arith.constant 0 : index
    %15 = vector.load %arg5[%c0_8, %c0_9] : memref<1x128xf32, #tpu.memory_space<vmem>>, vector<1x128xf32>
    tpu.vector_store %arg5[%c0_8, %c0_9], %14 {strides = array<i32>} : memref<1x128xf32, #tpu.memory_space<vmem>>, vector<1x128xf32>,
    return
  }
  func.func @transform_0(%arg0: i32) -> (i32, i32) {
    %c0_i32 = arith.constant 0 : i32
    %c0_i32_0 = arith.constant 0 : i32
    return %arg0, %c0_i32 : i32, i32
  }
  func.func @transform_1(%arg0: i32) -> (i32, i32) {
    %c0_i32 = arith.constant 0 : i32
    %c0_i32_0 = arith.constant 0 : i32
    %c0_i32_1 = arith.constant 0 : i32
    return %c0_i32, %c0_i32_0 : i32, i32
  }
  func.func @transform_2(%arg0: i32) -> (i32, i32) {
    %c0_i32 = arith.constant 0 : i32
    %c0_i32_0 = arith.constant 0 : i32
    %c0_i32_1 = arith.constant 0 : i32
    return %c0_i32, %c0_i32_0 : i32, i32
  }
  func.func @transform_3(%arg0: i32) -> i32 {
    %c0_i32 = arith.constant 0 : i32
    %c0_i32_0 = arith.constant 0 : i32
    return %c0_i32 : i32
  }
  func.func @transform_4(%arg0: i32) -> (i32, i32) {
    %c0_i32 = arith.constant 0 : i32
    %c0_i32_0 = arith.constant 0 : i32
    return %c0_i32, %arg0 : i32, i32
  }
}

</mosaic_0001>

<llo_original>
// kernel: critic_forward.1
$region0: #{critic_forward.1}
  #allocation0 [shape = 'u32[]', space=smem, size = 0x4, offset = 0x4, fixed_abs, tag = 'smem constant byte address 0x4 - core index']
  #allocation1 [shape = 'u32[144,128]{1,0:T(1,128)}', space=vmem, size = 0x12000, scoped, tag = 'internal scratch']
  #allocation2 [shape = 'f32[1]{0:T(128)S(6)}', space=smem, size = 0x200, scoped, tag = 'scoped memory for critic_forward.1']
  %s0 = inlined_call_operand.vmem [shape: f32[128,32], index: 0, kind: input, shape index: {}]
  %s1 = inlined_call_operand.vmem [shape: f32[32,128], index: 1, kind: input, shape index: {}]
  %s2 = inlined_call_operand.vmem [shape: f32[2,128], index: 2, kind: input, shape index: {}]
  %s3 = inlined_call_operand.<no memory space> [shape: f32[1], index: 3, kind: input, shape index: {}]
  %s4 = inlined_call_operand.vmem [shape: f32[1,128], index: 4, kind: output, shape index: {}]
  %s5 = sld [smem:[#allocation0]]
  $region26: #{critic_forward.1} parent=0
    _
  %s7 = ssub.s32 1, %s5
  %s8 = scalar_select 0, %s7, %s5
  %9 = sst [smem:[#allocation2]] %s3
  // Predicated region
  $region2: #{critic_forward.1} parent=0 // pred_check
    _
  $region3: #{critic_forward.1} parent=0 // pred_check_branch
    %11 = sbr.rel (0) target = $region5
  $region4: #{critic_forward.1} parent=0 // pred_region
    _
  $region5: #{critic_forward.1} parent=0 // pred_fallthru
    _
  // Predicated region
  $region6: #{critic_forward.1} parent=0 // pred_check
    _
  $region7: #{critic_forward.1} parent=0 // pred_check_branch
    %13 = sbr.rel (0) target = $region9
  $region8: #{critic_forward.1} parent=0 // pred_region
    _
  $region9: #{critic_forward.1} parent=0 // pred_fallthru
    _
  // Predicated region
  $region10: #{critic_forward.1} parent=0 // pred_check
    _
  $region11: #{critic_forward.1} parent=0 // pred_check_branch
    %15 = sbr.rel (0) target = $region13
  $region12: #{critic_forward.1} parent=0 // pred_region
    _
  $region13: #{critic_forward.1} parent=0 // pred_fallthru
    _
  // Predicated region
  $region14: #{critic_forward.1} parent=0 // pred_check
    _
  $region15: #{critic_forward.1} parent=0 // pred_check_branch
    %17 = sbr.rel (0) target = $region17
  $region16: #{critic_forward.1} parent=0 // pred_region
    _
  $region17: #{critic_forward.1} parent=0 // pred_fallthru
    _
  %v18 = vld [vmem:[%s0] sm:$0xff]
  %v19 = vld [vmem:[%s0 + $0x8] sm:$0xff]
  %v20 = vld [vmem:[%s0 + $0x10] sm:$0xff]
  %v21 = vld [vmem:[%s0 + $0x18] sm:$0xff]
  %v22 = vld [vmem:[%s0 + $0x20] sm:$0xff]
  %v23 = vld [vmem:[%s0 + $0x28] sm:$0xff]
  %v24 = vld [vmem:[%s0 + $0x30] sm:$0xff]
  %v25 = vld [vmem:[%s0 + $0x38] sm:$0xff]
  %v26 = vld [vmem:[%s0 + $0x40] sm:$0xff]
  %v27 = vld [vmem:[%s0 + $0x48] sm:$0xff]
  %v28 = vld [vmem:[%s0 + $0x50] sm:$0xff]
  %v29 = vld [vmem:[%s0 + $0x58] sm:$0xff]
  %v30 = vld [vmem:[%s0 + $0x60] sm:$0xff]
  %v31 = vld [vmem:[%s0 + $0x68] sm:$0xff]
  %v32 = vld [vmem:[%s0 + $0x70] sm:$0xff]
  %v33 = vld [vmem:[%s0 + $0x78] sm:$0xff]
  %v34 = vld [vmem:[%s2] sm:$0x3]
  %v35 = vld [vmem:[%s1] sm:$0xff]
  %v36 = vld [vmem:[%s1 + $0x8] sm:$0xff]
  %v37 = vld [vmem:[%s1 + $0x10] sm:$0xff]
  %v38 = vld [vmem:[%s1 + $0x18] sm:$0xff]
  %v39 = vlaneseq
  %v40 = vshrl.u32 %v39, 7
  %v41 = vsub.s32 0, %v40
  %v42 = vrot.slane %v34, %v41
  %vm43 = vcmask 261120
  %v45 = vsel %vm43, %v18, 0
  %v48 = vsel %vm43, %v19, 0
  %v51 = vsel %vm43, %v20, 0
  %v54 = vsel %vm43, %v21, 0
  %v57 = vsel %vm43, %v22, 0
  %v60 = vsel %vm43, %v23, 0
  %v63 = vsel %vm43, %v24, 0
  %v66 = vsel %vm43, %v25, 0
  %v69 = vsel %vm43, %v26, 0
  %v72 = vsel %vm43, %v27, 0
  %v75 = vsel %vm43, %v28, 0
  %v78 = vsel %vm43, %v29, 0
  %v81 = vsel %vm43, %v30, 0
  %v84 = vsel %vm43, %v31, 0
  %v87 = vsel %vm43, %v32, 0
  %v90 = vsel %vm43, %v33, 0
  %92 = vmatprep.subr.mxu0 0.0
  %93 = vmatpush1.msra.mxu0 %v35
  %94 = vmatprep.subr.mxu0 0.0
  %95 = vmatpush1.msra.mxu0 %v36
  %96 = vmatprep.subr.mxu0 0.0
  %97 = vmatpush1.msra.mxu0 %v37
  %98 = vmatprep.subr.mxu0 0.0
  %99 = vmatpush1.msra.mxu0 %v38
  %100 = vmatprep.subr.mxu0 0.0
  %101 = vmatpush1.msra.mxu0 0.0
  %102 = vmatprep.subr.mxu0 0.0
  %103 = vmatpush1.msra.mxu0 0.0
  %104 = vmatprep.subr.mxu0 0.0
  %105 = vmatpush1.msra.mxu0 0.0
  %106 = vmatprep.subr.mxu0 0.0
  %107 = vmatpush1.msra.mxu0 0.0
  %108 = vmatprep.subr.mxu0 0.0
  %109 = vmatpush1.msra.mxu0 0.0
  %110 = vmatprep.subr.mxu0 0.0
  %111 = vmatpush1.msra.mxu0 0.0
  %112 = vmatprep.subr.mxu0 0.0
  %113 = vmatpush1.msra.mxu0 0.0
  %114 = vmatprep.subr.mxu0 0.0
  %115 = vmatpush1.msra.mxu0 0.0
  %116 = vmatprep.subr.mxu0 0.0
  %117 = vmatpush1.msra.mxu0 0.0
  %118 = vmatprep.subr.mxu0 0.0
  %119 = vmatpush1.msra.mxu0 0.0
  %120 = vmatprep.subr.mxu0 0.0
  %121 = vmatpush1.msra.mxu0 0.0
  %122 = vmatprep.subr.mxu0 0.0
  %123 = vmatpush1.msra.mxu0 0.0
  %124 = vmatprep.subr.mxu0 0.0
  %125 = vmatpush1.msra.mxu0 0.0
  %126 = vmatprep.subr.mxu0 0.0
  %127 = vmatpush1.msra.mxu0 0.0
  %128 = vmatprep.subr.mxu0 0.0
  %129 = vmatpush1.msra.mxu0 0.0
  %130 = vmatprep.subr.mxu0 0.0
  %131 = vmatpush1.msra.mxu0 0.0
  %132 = vmatprep.subr.mxu0 0.0
  %133 = vmatpush1.msra.mxu0 0.0
  %134 = vmatprep.subr.mxu0 0.0
  %135 = vmatpush1.msra.mxu0 0.0
  %136 = vmatprep.subr.mxu0 0.0
  %137 = vmatpush1.msra.mxu0 0.0
  %138 = vmatprep.subr.mxu0 0.0
  %139 = vmatpush1.msra.mxu0 0.0
  %140 = vmatprep.subr.mxu0 0.0
  %141 = vmatpush1.msra.mxu0 0.0
  %142 = vmatprep.subr.mxu0 0.0
  %143 = vmatpush1.msra.mxu0 0.0
  %144 = vmatprep.subr.mxu0 0.0
  %145 = vmatpush1.msra.mxu0 0.0
  %146 = vmatprep.subr.mxu0 0.0
  %147 = vmatpush1.msra.mxu0 0.0
  %148 = vmatprep.subr.mxu0 0.0
  %149 = vmatpush1.msra.mxu0 0.0
  %150 = vmatprep.subr.mxu0 0.0
  %151 = vmatpush1.msra.mxu0 0.0
  %152 = vmatprep.subr.mxu0 0.0
  %153 = vmatpush1.msra.mxu0 0.0
  %154 = vmatprep.subr.mxu0 0.0
  %155 = vmatpush1.msra.mxu0 0.0
  %156 = vmatprep.mubr.f32.mxu0 0.0
  %157 = vmatmul.mubr.f32.gmra.mrb[0].mxu0 %v45
  %v158 = vpop.f32.mrb[0].mxu0
  %v159 = vadd.f32 %v42, %v158
  %v160 = vpop.f32.mrb[0].mxu0
  %161 = vmatprep.mubr.f32.mxu0 0.0
  %162 = vmatmul.mubr.f32.gmra.mrb[0].mxu0 %v48
  %v163 = vpop.f32.mrb[0].mxu0
  %v164 = vadd.f32 %v42, %v163
  %v165 = vpop.f32.mrb[0].mxu0
  %166 = vmatprep.mubr.f32.mxu0 0.0
  %167 = vmatmul.mubr.f32.gmra.mrb[0].mxu0 %v51
  %v168 = vpop.f32.mrb[0].mxu0
  %v169 = vadd.f32 %v42, %v168
  %v170 = vpop.f32.mrb[0].mxu0
  %171 = vmatprep.mubr.f32.mxu0 0.0
  %172 = vmatmul.mubr.f32.gmra.mrb[0].mxu0 %v54
  %v173 = vpop.f32.mrb[0].mxu0
  %v174 = vadd.f32 %v42, %v173
  %v175 = vpop.f32.mrb[0].mxu0
  %176 = vmatprep.mubr.f32.mxu0 0.0
  %177 = vmatmul.mubr.f32.gmra.mrb[0].mxu0 %v57
  %v178 = vpop.f32.mrb[0].mxu0
  %v179 = vadd.f32 %v42, %v178
  %v180 = vpop.f32.mrb[0].mxu0
  %181 = vmatprep.mubr.f32.mxu0 0.0
  %182 = vmatmul.mubr.f32.gmra.mrb[0].mxu0 %v60
  %v183 = vpop.f32.mrb[0].mxu0
  %v184 = vadd.f32 %v42, %v183
  %v185 = vpop.f32.mrb[0].mxu0
  %186 = vmatprep.mubr.f32.mxu0 0.0
  %187 = vmatmul.mubr.f32.gmra.mrb[0].mxu0 %v63
  %v188 = vpop.f32.mrb[0].mxu0
  %v189 = vadd.f32 %v42, %v188
  %v190 = vpop.f32.mrb[0].mxu0
  %191 = vmatprep.mubr.f32.mxu0 0.0
  %192 = vmatmul.mubr.f32.gmra.mrb[0].mxu0 %v66
  %v193 = vpop.f32.mrb[0].mxu0
  %v194 = vadd.f32 %v42, %v193
  %v195 = vpop.f32.mrb[0].mxu0
  %196 = vmatprep.mubr.f32.mxu0 0.0
  %197 = vmatmul.mubr.f32.gmra.mrb[0].mxu0 %v69
  %v198 = vpop.f32.mrb[0].mxu0
  %v199 = vadd.f32 %v42, %v198
  %v200 = vpop.f32.mrb[0].mxu0
  %201 = vmatprep.mubr.f32.mxu0 0.0
  %202 = vmatmul.mubr.f32.gmra.mrb[0].mxu0 %v72
  %v203 = vpop.f32.mrb[0].mxu0
  %v204 = vadd.f32 %v42, %v203
  %v205 = vpop.f32.mrb[0].mxu0
  %206 = vmatprep.mubr.f32.mxu0 0.0
  %207 = vmatmul.mubr.f32.gmra.mrb[0].mxu0 %v75
  %v208 = vpop.f32.mrb[0].mxu0
  %v209 = vadd.f32 %v42, %v208
  %v210 = vpop.f32.mrb[0].mxu0
  %211 = vmatprep.mubr.f32.mxu0 0.0
  %212 = vmatmul.mubr.f32.gmra.mrb[0].mxu0 %v78
  %v213 = vpop.f32.mrb[0].mxu0
  %v214 = vadd.f32 %v42, %v213
  %v215 = vpop.f32.mrb[0].mxu0
  %216 = vmatprep.mubr.f32.mxu0 0.0
  %217 = vmatmul.mubr.f32.gmra.mrb[0].mxu0 %v81
  %v218 = vpop.f32.mrb[0].mxu0
  %v219 = vadd.f32 %v42, %v218
  %v220 = vpop.f32.mrb[0].mxu0
  %221 = vmatprep.mubr.f32.mxu0 0.0
  %222 = vmatmul.mubr.f32.gmra.mrb[0].mxu0 %v84
  %v223 = vpop.f32.mrb[0].mxu0
  %v224 = vadd.f32 %v42, %v223
  %v225 = vpop.f32.mrb[0].mxu0
  %226 = vmatprep.mubr.f32.mxu0 0.0
  %227 = vmatmul.mubr.f32.gmra.mrb[0].mxu0 %v87
  %v228 = vpop.f32.mrb[0].mxu0
  %v229 = vadd.f32 %v42, %v228
  %v230 = vpop.f32.mrb[0].mxu0
  %231 = vmatprep.mubr.f32.mxu0 0.0
  %232 = vmatmul.mubr.f32.gmra.mrb[0].mxu0 %v90
  %v233 = vpop.f32.mrb[0].mxu0
  %v234 = vadd.f32 %v42, %v233
  %v235 = vpop.f32.mrb[0].mxu0
  %236 = vdwg.mxu0
  %v237 = vmax.f32 %v159, 0.0
  %v238 = vmax.f32 %v164, 0.0
  %v239 = vmax.f32 %v169, 0.0
  %v240 = vmax.f32 %v174, 0.0
  %v241 = vmax.f32 %v179, 0.0
  %v242 = vmax.f32 %v184, 0.0
  %v243 = vmax.f32 %v189, 0.0
  %v244 = vmax.f32 %v194, 0.0
  %v245 = vmax.f32 %v199, 0.0
  %v246 = vmax.f32 %v204, 0.0
  %v247 = vmax.f32 %v209, 0.0
  %v248 = vmax.f32 %v214, 0.0
  %v249 = vmax.f32 %v219, 0.0
  %v250 = vmax.f32 %v224, 0.0
  %v251 = vmax.f32 %v229, 0.0
  %v252 = vmax.f32 %v234, 0.0
  %s253 = sld [smem:[#allocation2]]
  %v254 = vstv %s253
  %v256 = vrot.slane %v34, 1
  %258 = vmatprep.subr.mxu0 0.0
  %259 = vmatpush1.xpose.msra.mxu0 %v237
  %260 = vmatprep.subr.mxu0 0.0
  %261 = vmatpush1.xpose.msra.mxu0 %v238
  %262 = vmatprep.subr.mxu0 0.0
  %263 = vmatpush1.xpose.msra.mxu0 %v239
  %264 = vmatprep.subr.mxu0 0.0
  %265 = vmatpush1.xpose.msra.mxu0 %v240
  %266 = vmatprep.subr.mxu0 0.0
  %267 = vmatpush1.xpose.msra.mxu0 %v241
  %268 = vmatprep.subr.mxu0 0.0
  %269 = vmatpush1.xpose.msra.mxu0 %v242
  %270 = vmatprep.subr.mxu0 0.0
  %271 = vmatpush1.xpose.msra.mxu0 %v243
  %272 = vmatprep.subr.mxu0 0.0
  %273 = vmatpush1.xpose.msra.mxu0 %v244
  %274 = vmatprep.subr.mxu0 0.0
  %275 = vmatpush1.xpose.msra.mxu0 %v245
  %276 = vmatprep.subr.mxu0 0.0
  %277 = vmatpush1.xpose.msra.mxu0 %v246
  %278 = vmatprep.subr.mxu0 0.0
  %279 = vmatpush1.xpose.msra.mxu0 %v247
  %280 = vmatprep.subr.mxu0 0.0
  %281 = vmatpush1.xpose.msra.mxu0 %v248
  %282 = vmatprep.subr.mxu0 0.0
  %283 = vmatpush1.xpose.msra.mxu0 %v249
  %284 = vmatprep.subr.mxu0 0.0
  %285 = vmatpush1.xpose.msra.mxu0 %v250
  %286 = vmatprep.subr.mxu0 0.0
  %287 = vmatpush1.xpose.msra.mxu0 %v251
  %288 = vmatprep.subr.mxu0 0.0
  %289 = vmatpush1.xpose.msra.mxu0 %v252
  %290 = vmatprep.subr.mxu0 0.0
  %291 = vmatpush1.xpose.msra.mxu0 0.0
  %292 = vmatprep.subr.mxu0 0.0
  %293 = vmatpush1.xpose.msra.mxu0 0.0
  %294 = vmatprep.subr.mxu0 0.0
  %295 = vmatpush1.xpose.msra.mxu0 0.0
  %296 = vmatprep.subr.mxu0 0.0
  %297 = vmatpush1.xpose.msra.mxu0 0.0
  %298 = vmatprep.subr.mxu0 0.0
  %299 = vmatpush1.xpose.msra.mxu0 0.0
  %300 = vmatprep.subr.mxu0 0.0
  %301 = vmatpush1.xpose.msra.mxu0 0.0
  %302 = vmatprep.subr.mxu0 0.0
  %303 = vmatpush1.xpose.msra.mxu0 0.0
  %304 = vmatprep.subr.mxu0 0.0
  %305 = vmatpush1.xpose.msra.mxu0 0.0
  %306 = vmatprep.subr.mxu0 0.0
  %307 = vmatpush1.xpose.msra.mxu0 0.0
  %308 = vmatprep.subr.mxu0 0.0
  %309 = vmatpush1.xpose.msra.mxu0 0.0
  %310 = vmatprep.subr.mxu0 0.0
  %311 = vmatpush1.xpose.msra.mxu0 0.0
  %312 = vmatprep.subr.mxu0 0.0
  %313 = vmatpush1.xpose.msra.mxu0 0.0
  %314 = vmatprep.subr.mxu0 0.0
  %315 = vmatpush1.xpose.msra.mxu0 0.0
  %316 = vmatprep.subr.mxu0 0.0
  %317 = vmatpush1.xpose.msra.mxu0 0.0
  %318 = vmatprep.subr.mxu0 0.0
  %319 = vmatpush1.xpose.msra.mxu0 0.0
  %320 = vmatprep.subr.mxu0 0.0
  %321 = vmatpush1.xpose.msra.mxu0 0.0
  %322 = vmatprep.mubr.f32.mxu0 0.0
  %323 = vmatmul.mubr.f32.gmra.mrb[0].mxu0 %v256
  %v324 = vpop.f32.mrb[0].mxu0
  %v325 = vadd.f32 %v254, %v324
  %v326 = vpop.f32.mrb[0].mxu0
  %327 = vdwg.mxu0
  %328 = vst [vmem:[%s4] sm:$0x1] %v325
  // Predicated region
  $region18: #{critic_forward.1} parent=0 // pred_check
    _
  $region19: #{critic_forward.1} parent=0 // pred_check_branch
    %330 = sbr.rel (0) target = $region21
  $region20: #{critic_forward.1} parent=0 // pred_region
    _
  $region21: #{critic_forward.1} parent=0 // pred_fallthru
    _
  // Predicated region
  $region22: #{critic_forward.1} parent=0 // pred_check
    _
  $region23: #{critic_forward.1} parent=0 // pred_check_branch
    %332 = sbr.rel (0) target = $region25
  $region24: #{critic_forward.1} parent=0 // pred_region
    _
  $region25: #{critic_forward.1} parent=0 // pred_fallthru
    _

</llo_original>
